<compile_context>
chip_gen: v7x
topology: tpu7x:2x2x1
jax: 0.10.0
libtpu: 0.0.40
codegen_flags: <defaults>
</compile_context>

<pallas_src>
import jax
import jax.numpy as jnp
from jax.experimental import pallas as pl
from jax.experimental.pallas import tpu as pltpu


# ----------------------------------------------------------------------------
# Parameter construction (mirrors nn.Parameter(torch.zeros(...)) init)
# ----------------------------------------------------------------------------
def init_learnable_pe(embed_dim: int, max_len: int) -> jnp.ndarray:
    if embed_dim > 1:
        return jnp.zeros((1, max_len, embed_dim), dtype=jnp.float32)
    elif embed_dim == 1:
        return jnp.zeros((1, max_len), dtype=jnp.float32)
    raise ValueError("embed_dim must be >= 1")


# ----------------------------------------------------------------------------
# Tiling helpers
# ----------------------------------------------------------------------------
_VMEM_LIMIT = 32 * 1024 * 1024      # explicit scoped-VMEM limit (safe on all gens)
_MAX_TILE_ELEMS = 512 * 1024        # <= 2 MiB f32 per tile (double-buffer friendly)


def _choose_col_tile(C: int, max_cols: int = 4096):
    """Lane-dense column tiling: full extent unless C is a large multiple of 128."""
    if C % 128 != 0 or C <= max_cols:
        return 1, C                 # full-extent last dim (always legal)
    t = max_cols // 128
    while t >= 1:
        if (C // 128) % t == 0:
            return C // (t * 128), t * 128
        t -= 1
    return C // 128, 128


def _choose_matmul_col_tile(E: int, pref: int = 256):
    """Output-N tiling for the fused matmul: full E unless large & 128-divisible."""
    if E % 128 != 0 or E <= 2 * pref:
        return 1, E
    t = (2 * pref) // 128
    while t >= 1:
        if (E // 128) % t == 0:
            return E // (t * 128), t * 128
        t -= 1
    return E // 128, 128


def _row_tile_dividing(S: int, max_rows: int):
    """Largest multiple-of-8 divisor of S that is <= max_rows; None if S % 8 != 0."""
    if S % 8 != 0:
        return None
    t = min(S, max(8, (max_rows // 8) * 8))
    t = (t // 8) * 8
    while t >= 8:
        if S % t == 0:
            return t
        t -= 8
    return 8  # unreachable: 8 divides S


# ----------------------------------------------------------------------------
# Kernel bodies
# ----------------------------------------------------------------------------
def _pe_add_kernel(x_ref, pe_ref, o_ref):
    # pe block broadcasts over rows when its leading dim is 1; exact match otherwise.
    acc = x_ref[...].astype(jnp.float32) + pe_ref[...].astype(jnp.float32)
    o_ref[...] = acc.astype(o_ref.dtype)


def _embed_pe_kernel(x_ref, w_ref, pe_ref, o_ref):
    # x: (tm, Din), w: (Din, tn), pe: (tm, tn) [bias already folded in], o: (tm, tn)
    acc = jnp.dot(x_ref[...], w_ref[...], preferred_element_type=jnp.float32)
    o_ref[...] = (acc + pe_ref[...]).astype(o_ref.dtype)


# ----------------------------------------------------------------------------
# Standalone PE add (LearnablePositionalEncoding.forward)
# ----------------------------------------------------------------------------
def _broadcast_add_rows(x2: jnp.ndarray, pe2: jnp.ndarray) -> jnp.ndarray:
    """x2: (R, C); pe2: (1, C) broadcast over rows."""
    R, C = x2.shape
    n_ct, ct = _choose_col_tile(C)
    if R <= 8 or R * ct <= _MAX_TILE_ELEMS:
        rt, n_rt = R, 1
    else:
        rt = max(8, ((_MAX_TILE_ELEMS // ct) // 8) * 8)
        rt = min(rt, R)
        n_rt = pl.cdiv(R, rt)

    itemsize = x2.dtype.itemsize
    cost = pl.CostEstimate(
        flops=R * C,
        transcendentals=0,
        bytes_accessed=2 * R * C * itemsize + C * pe2.dtype.itemsize,
    )

    return pl.pallas_call(
        _pe_add_kernel,
        out_shape=jax.ShapeDtypeStruct((R, C), x2.dtype),
        grid_spec=pltpu.PrefetchScalarGridSpec(
            num_scalar_prefetch=0,
            grid=(n_rt, n_ct),
            in_specs=[
                pl.BlockSpec((rt, ct), lambda i, j: (i, j)),
                pl.BlockSpec((1, ct), lambda i, j: (0, j)),   # PE resident across rows
            ],
            out_specs=pl.BlockSpec((rt, ct), lambda i, j: (i, j)),
        ),
        compiler_params=pltpu.CompilerParams(
            dimension_semantics=("parallel", "parallel"),
            vmem_limit_bytes=_VMEM_LIMIT,
        ),
        cost_estimate=cost,
    )(x2, pe2)


def _pe_add_modular(x2: jnp.ndarray, pe2: jnp.ndarray, S: int) -> jnp.ndarray:
    """x2: (B*S, E); pe2: (S, E).  Requires S % 8 == 0 and E % 128 == 0."""
    M, E = x2.shape
    n_ct, ct = _choose_col_tile(E)
    max_rows = max(8, min(1024, _MAX_TILE_ELEMS // ct))
    rt = _row_tile_dividing(S, max_rows)
    npe = S // rt
    n_rt = M // rt

    itemsize = x2.dtype.itemsize
    cost = pl.CostEstimate(
        flops=M * E,
        transcendentals=0,
        bytes_accessed=2 * M * E * itemsize + S * E * pe2.dtype.itemsize,
    )

    return pl.pallas_call(
        _pe_add_kernel,
        out_shape=jax.ShapeDtypeStruct((M, E), x2.dtype),
        grid_spec=pltpu.PrefetchScalarGridSpec(
            num_scalar_prefetch=0,
            grid=(n_rt, n_ct),
            in_specs=[
                pl.BlockSpec((rt, ct), lambda i, j: (i, j)),
                # PE repeats every S rows -> modular row map over the PE table.
                pl.BlockSpec((rt, ct), lambda i, j, npe=npe: (i % npe, j)),
            ],
            out_specs=pl.BlockSpec((rt, ct), lambda i, j: (i, j)),
        ),
        compiler_params=pltpu.CompilerParams(
            dimension_semantics=("parallel", "parallel"),
            vmem_limit_bytes=_VMEM_LIMIT,
        ),
        cost_estimate=cost,
    )(x2, pe2)


def learnable_pe_forward(x: jnp.ndarray, pe: jnp.ndarray) -> jnp.ndarray:
    """LearnablePositionalEncoding.forward via lane-dense Pallas adds."""
    if x.ndim == 3:
        B, S, E = x.shape
        pe_slice = pe[:, :S, :]
        if E % 128 == 0 and S % 8 == 0:
            # Fill sublanes even at small B: (B*S, E) rows with modular PE map.
            out2 = _pe_add_modular(x.reshape(B * S, E), pe_slice.reshape(S, E), S)
            return out2.reshape(B, S, E)
        # Fallback: lane-dense (B, S*E) view, PE broadcast over batch rows.
        out2 = _broadcast_add_rows(x.reshape(B, S * E), pe_slice.reshape(1, S * E))
        return out2.reshape(B, S, E)
    elif x.ndim == 2:
        B, S = x.shape
        return _broadcast_add_rows(x, pe[:, :S])
    raise ValueError("x must be rank 2 (embed_dim==1) or rank 3 (embed_dim>1)")


# ----------------------------------------------------------------------------
# Fused embedding Linear + PE add:  out = x @ W + bias + pe[:, :S, :]
# (encoder/decoder front-end; bias folded into PE wrapper-side)
# ----------------------------------------------------------------------------
def _embed_pe_per_batch(x, w, pe_b, out_dtype):
    """Fallback when S is not a multiple of 8: one batch element per grid step."""
    B, S, Din = x.shape
    E = w.shape[1]
    cost = pl.CostEstimate(
        flops=2 * B * S * Din * E + B * S * E,
        transcendentals=0,
        bytes_accessed=(x.size * x.dtype.itemsize + w.size * w.dtype.itemsize
                        + pe_b.size * pe_b.dtype.itemsize
                        + B * S * E * jnp.dtype(out_dtype).itemsize),
    )
    return pl.pallas_call(
        _embed_pe_kernel,
        out_shape=jax.ShapeDtypeStruct((B, S, E), out_dtype),
        grid_spec=pltpu.PrefetchScalarGridSpec(
            num_scalar_prefetch=0,
            grid=(B,),
            in_specs=[
                pl.BlockSpec((None, S, Din), lambda b: (b, 0, 0)),
                pl.BlockSpec((Din, E), lambda b: (0, 0)),
                pl.BlockSpec((S, E), lambda b: (0, 0)),      # PE (+bias) resident
            ],
            out_specs=pl.BlockSpec((None, S, E), lambda b: (b, 0, 0)),
        ),
        compiler_params=pltpu.CompilerParams(
            dimension_semantics=("parallel",),
            vmem_limit_bytes=_VMEM_LIMIT,
        ),
        cost_estimate=cost,
    )(x, w, pe_b)


def embed_plus_pe_forward(x: jnp.ndarray, w: jnp.ndarray, bias: jnp.ndarray,
                          pe: jnp.ndarray, use_bf16: bool = False) -> jnp.ndarray:
    """out[b, s] = x[b, s] @ W + bias + pe[0, s]   (single fused HBM pass)."""
    B, S, Din = x.shape
    E = w.shape[1]
    out_dtype = x.dtype

    # Fold bias into the PE slice (one fewer input stream / VMEM block).
    pe_b = (pe[:, :S, :].reshape(S, E).astype(jnp.float32)
            + bias.reshape(1, E).astype(jnp.float32))

    if use_bf16:
        x = x.astype(jnp.bfloat16)
        w = w.astype(jnp.bfloat16)

    tm = _row_tile_dividing(S, max_rows=256)
    if tm is None:
        return _embed_pe_per_batch(x, w, pe_b, out_dtype)

    # Main path: retile over M = B*S, modular PE row map, bounded tiles.
    M = B * S
    n_tn, tn = _choose_matmul_col_tile(E)
    npe = S // tm
    x2 = x.reshape(M, Din)

    cost = pl.CostEstimate(
        flops=2 * M * Din * E + M * E,
        transcendentals=0,
        bytes_accessed=(x2.size * x2.dtype.itemsize + w.size * w.dtype.itemsize
                        + pe_b.size * pe_b.dtype.itemsize
                        + M * E * jnp.dtype(out_dtype).itemsize),
    )

    out2 = pl.pallas_call(
        _embed_pe_kernel,
        out_shape=jax.ShapeDtypeStruct((M, E), out_dtype),
        grid_spec=pltpu.PrefetchScalarGridSpec(
            num_scalar_prefetch=0,
            grid=(M // tm, n_tn),
            in_specs=[
                pl.BlockSpec((tm, Din), lambda i, j: (i, 0)),
                pl.BlockSpec((Din, tn), lambda i, j: (0, j)),
                pl.BlockSpec((tm, tn), lambda i, j, npe=npe: (i % npe, j)),
            ],
            out_specs=pl.BlockSpec((tm, tn), lambda i, j: (i, j)),
        ),
        compiler_params=pltpu.CompilerParams(
            dimension_semantics=("parallel", "parallel"),
            vmem_limit_bytes=_VMEM_LIMIT,
        ),
        cost_estimate=cost,
    )(x2, w, pe_b)
    return out2.reshape(B, S, E)


# ----------------------------------------------------------------------------
# Demo / correctness check
# ----------------------------------------------------------------------------
if __name__ == "__main__":
    key = jax.random.PRNGKey(0)
    ks = jax.random.split(key, 10)
    B = 2

    # ---- (1) LearnablePositionalEncoding, embed_dim>1, E not 128-divisible ----
    S, E, MAX_LEN = 8, 32, 64
    x3 = jax.random.normal(ks[0], (B, S, E), dtype=jnp.float32)
    pe3 = 0.02 * jax.random.normal(ks[1], (1, MAX_LEN, E), dtype=jnp.float32)
    out3 = jax.block_until_ready(learnable_pe_forward(x3, pe3))
    assert out3.shape == (B, S, E)
    assert jnp.allclose(out3, x3 + pe3[:, :S, :], atol=1e-6), "PE add (E=32) mismatch"

    # ---- (2) embed_dim>1, E % 128 == 0 -> M = B*S modular-row path ----
    S2, E2, MAX_LEN2 = 16, 128, 32
    xw = jax.random.normal(ks[2], (B, S2, E2), dtype=jnp.float32)
    pew = 0.02 * jax.random.normal(ks[3], (1, MAX_LEN2, E2), dtype=jnp.float32)
    outw = jax.block_until_ready(learnable_pe_forward(xw, pew))
    assert outw.shape == (B, S2, E2)
    assert jnp.allclose(outw, xw + pew[:, :S2, :], atol=1e-6), "PE add (E=128) mismatch"

    # ---- (3) embed_dim == 1 path: x (B, S) + pe[:, :S] ----
    S1, MAX_LEN1 = 128, 256
    x1 = jax.random.normal(ks[4], (B, S1), dtype=jnp.float32)
    pe1 = 0.02 * jax.random.normal(ks[5], (1, MAX_LEN1), dtype=jnp.float32)
    out1 = jax.block_until_ready(learnable_pe_forward(x1, pe1))
    assert out1.shape == (B, S1)
    assert jnp.allclose(out1, x1 + pe1[:, :S1], atol=1e-6), "embed_dim==1 PE mismatch"

    # ---- (4) fused embedding Linear + PE add (encoder/decoder front-end) ----
    Din = 16
    tgt = jax.random.normal(ks[6], (B, S, Din), dtype=jnp.float32)
    w = jax.random.normal(ks[7], (Din, E), dtype=jnp.float32) / jnp.sqrt(Din)
    bias = jnp.linspace(-0.1, 0.1, E, dtype=jnp.float32)
    outf = jax.block_until_ready(embed_plus_pe_forward(tgt, w, bias, pe3))
    reff = (jnp.einsum("bsi,ie->bse", tgt, w, precision=jax.lax.Precision.HIGHEST)
            + bias[None, None, :] + pe3[:, :S, :])
    assert outf.shape == (B, S, E)
    assert jnp.allclose(outf, reff, atol=1e-3, rtol=1e-3), "fused embed+PE mismatch"

    # ---- (5) fused fallback path (S not a multiple of 8) ----
    So = 6
    tgto = jax.random.normal(ks[8], (B, So, Din), dtype=jnp.float32)
    outo = jax.block_until_ready(embed_plus_pe_forward(tgto, w, bias, pe3))
    refo = (jnp.einsum("bsi,ie->bse", tgto, w, precision=jax.lax.Precision.HIGHEST)
            + bias[None, None, :] + pe3[:, :So, :])
    assert outo.shape == (B, So, E)
    assert jnp.allclose(outo, refo, atol=1e-3, rtol=1e-3), "fused fallback mismatch"

    print("KERNEL_OK")
</pallas_src>

<mosaic_0001>
module attributes {stable_mosaic.version = 11 : i64} {
  func.func @_pe_add_kernel(%arg0: i32, %arg1: i32, %arg2: memref<2x256xf32, #tpu.memory_space<vmem>>, %arg3: memref<1x256xf32, #tpu.memory_space<vmem>>, %arg4: memref<2x256xf32, #tpu.memory_space<vmem>>) attributes {dimension_semantics = [#tpu.dimension_semantics<parallel>, #tpu.dimension_semantics<parallel>], iteration_bounds = array<i64: 1, 1>, scalar_prefetch = 0 : i64, scratch_operands = 0 : i64, tpu.core_type = #tpu.core_type<tc>, window_params = [{transform_indices = @transform_0, window_bounds = array<i64: 2, 256>}, {transform_indices = @transform_1, window_bounds = array<i64: 1, 256>}, {transform_indices = @transform_2, window_bounds = array<i64: 2, 256>}]} {
    %c0 = arith.constant 0 : index
    %c0_0 = arith.constant 0 : index
    %0 = vector.load %arg2[%c0, %c0_0] : memref<2x256xf32, #tpu.memory_space<vmem>>, vector<2x256xf32>
    %c0_1 = arith.constant 0 : index
    %c0_2 = arith.constant 0 : index
    %1 = vector.load %arg3[%c0_1, %c0_2] : memref<1x256xf32, #tpu.memory_space<vmem>>, vector<1x256xf32>
    %2 = vector.broadcast %1 : vector<1x256xf32> to vector<2x256xf32>
    %3 = arith.addf %0, %2 : vector<2x256xf32>
    %c0_3 = arith.constant 0 : index
    %c0_4 = arith.constant 0 : index
    %4 = vector.load %arg4[%c0_3, %c0_4] : memref<2x256xf32, #tpu.memory_space<vmem>>, vector<2x256xf32>
    tpu.vector_store %arg4[%c0_3, %c0_4], %3 {strides = array<i32>} : memref<2x256xf32, #tpu.memory_space<vmem>>, vector<2x256xf32>,
    return
  }
  func.func @transform_0(%arg0: i32, %arg1: i32) -> (i32, i32) {
    %c0_i32 = arith.constant 0 : i32
    return %arg0, %arg1 : i32, i32
  }
  func.func @transform_1(%arg0: i32, %arg1: i32) -> (i32, i32) {
    %c0_i32 = arith.constant 0 : i32
    %c0_i32_0 = arith.constant 0 : i32
    return %c0_i32, %arg1 : i32, i32
  }
  func.func @transform_2(%arg0: i32, %arg1: i32) -> (i32, i32) {
    %c0_i32 = arith.constant 0 : i32
    return %arg0, %arg1 : i32, i32
  }
}

</mosaic_0001>

<llo_original>
// kernel: tpu_custom_call.1
$region0: #{tpu_custom_call.1}
  #allocation0 [shape = 'u32[]', space=smem, size = 0x4, offset = 0x4, fixed_abs, tag = 'smem constant byte address 0x4 - core index']
  #allocation1 [shape = 'u32[144,128]{1,0:T(1,128)}', space=vmem, size = 0x12000, scoped, tag = 'internal scratch']
  %s0 = inlined_call_operand.hbm [shape: f32[2,256], index: 0, kind: input, shape index: {}]
  %s1 = inlined_call_operand.vmem [shape: f32[1,256], index: 1, kind: input, shape index: {}]
  %s2 = inlined_call_operand.hbm [shape: f32[2,256], index: 2, kind: output, shape index: {}]
  %s3 = sld [smem:[#allocation0]]
  $region22: #{tpu_custom_call.1} parent=0
    _
  %s5 = ssub.s32 1, %s3
  %s6 = scalar_select 0, %s5, %s3
  $region1: #{tpu_custom_call.1} parent=0
    #allocation2 [shape = 'u8[2048]{0}', space=vmem, size = 0x800, scoped, tag = 'input window, operand 0, single buffered']
    #allocation3 [shape = 's32[1]{0}', space=sflag, size = 0x4, scoped, tag = 'scoped memory for tpu_custom_call.1']
    #allocation4 [shape = 's32[1]{0}', space=sflag, size = 0x4, scoped, tag = 'scoped memory for tpu_custom_call.1']
    #allocation5 [shape = 'u8[2048]{0}', space=vmem, size = 0x800, scoped, tag = 'output window, operand 0, single buffered']
    %7 = vsyncpa [#allocation3], 0
    %8 = vsyncpa [#allocation4], 0
    // Predicated region
    $region2: #{tpu_custom_call.1} parent=1 // pred_check
      _
    $region3: #{tpu_custom_call.1} parent=1 // pred_check_branch
      %10 = sbr.rel (0) target = $region5
    $region4: #{tpu_custom_call.1} parent=1 // pred_region
      %s12 = ssub.s32 64, 64
      %13 = vsyncadd [#allocation3], %s12
      %s15 = sshll.u32 [#allocation2], 4
      %s16 = int_to_ptr.vmem [resolvable:$true] %s15
      %18 = dma.hbm_to_vmem [thread:$0]  %s0, 64, %s16, [#allocation3]
    $region5: #{tpu_custom_call.1} parent=1 // pred_fallthru
      _
    // Predicated region
    $region6: #{tpu_custom_call.1} parent=1 // pred_check
      _
    $region7: #{tpu_custom_call.1} parent=1 // pred_check_branch
      %20 = sbr.rel (0) target = $region9
    $region8: #{tpu_custom_call.1} parent=1 // pred_region
      _
    $region9: #{tpu_custom_call.1} parent=1 // pred_fallthru
      _
    // Predicated region
    $region10: #{tpu_custom_call.1} parent=1 // pred_check
      _
    $region11: #{tpu_custom_call.1} parent=1 // pred_check_branch
      %22 = sbr.rel (0) target = $region13
    $region12: #{tpu_custom_call.1} parent=1 // pred_region
      %23 = dma.done [#allocation3], 64
    $region13: #{tpu_custom_call.1} parent=1 // pred_fallthru
      _
    %v24 = vld [vmem:[#allocation2] sm:$0xf]
    %v25 = vld [vmem:[%s1] sm:$0x3]
    %v27 = vlaneseq
    %v28 = vshrl.u32 %v27, 7
    %v29 = vsub.s32 0, %v28
    %v30 = vrot.slane %v25, %v29
    %v31 = vlaneseq
    %v32 = vshrl.u32 %v31, 7
    %v33 = vsub.s32 1, %v32
    %v34 = vrot.slane %v25, %v33
    %v35 = vcombine.low %v30, %v34
    %v37 = vunpack.c.l.s4 1983009808
    %v38 = vunpack.c.0.s8 %v37
    %v39 = vlaneseq
    %v40 = vshrl.u32 %v39, 7
    %v41 = vsub.s32 %v38, %v40
    %v42 = vrot.slane %v35, %v41
    %v44 = vadd.f32 %v24, %v42
    %45 = vst [vmem:[#allocation5] sm:$0xf] %v44
    // Predicated region
    $region14: #{tpu_custom_call.1} parent=1 // pred_check
      _
    $region15: #{tpu_custom_call.1} parent=1 // pred_check_branch
      %47 = sbr.rel (0) target = $region17
    $region16: #{tpu_custom_call.1} parent=1 // pred_region
      %s49 = ssub.s32 64, 64
      %50 = vsyncadd [#allocation4], %s49
      %s52 = sshll.u32 [#allocation5], 4
      %s53 = int_to_ptr.vmem [resolvable:$true] %s52
      %55 = dma.vmem_to_hbm [thread:$0]  %s53, 64, %s2, [#allocation4]
    $region17: #{tpu_custom_call.1} parent=1 // pred_fallthru
      _
    // Predicated region
    $region18: #{tpu_custom_call.1} parent=1 // pred_check
      _
    $region19: #{tpu_custom_call.1} parent=1 // pred_check_branch
      %57 = sbr.rel (0) target = $region21
    $region20: #{tpu_custom_call.1} parent=1 // pred_region
      %58 = dma.done [#allocation4], 64
    $region21: #{tpu_custom_call.1} parent=1 // pred_fallthru
      _
    %59 = vsyncpa [#allocation3], 1
    %60 = vsyncpa [#allocation4], 1

</llo_original>
